<compile_context>
chip_gen: v7x
topology: tpu7x:2x2x1
jax: 0.10.0
libtpu: 0.0.40
codegen_flags: <defaults>
</compile_context>

<pallas_src>
import jax
import jax.numpy as jnp
from jax import lax
from jax.experimental import pallas as pl
from jax.experimental.pallas import tpu as pltpu


def _round_up(v, m):
    return ((v + m - 1) // m) * m


def _tile_budget_bytes():
    """Per-tile soft VMEM budget. Peak usage ~= 4x this (double-buffered in+out)."""
    try:
        kind = jax.devices()[0].device_kind.lower()
    except Exception:
        kind = ""
    if ("v6" in kind) or ("v7" in kind) or ("7x" in kind):
        return 5 * 1024 * 1024   # 32 MiB scoped default -> peak ~20 MiB
    # v5e (16 MiB scoped default), older parts, or unknown: stay conservative.
    return 3 * 1024 * 1024       # peak ~12 MiB


def _row_align(itemsize):
    """Sublane alignment: sub-32-bit dtypes pack along sublanes."""
    return {4: 8, 2: 16, 1: 32}.get(itemsize, 8)


def _select_tiles(rows, cols, itemsize, budget, row_align):
    """Pick (row_tile, col_tile). Blocks are either alignment-multiples or the
    full dimension, so they always satisfy the (8,128) rule; pl.cdiv grids
    handle any remainder with masked edge blocks."""
    row_bytes = cols * itemsize
    if row_align * row_bytes <= budget:
        # Full-row (contiguous) blocks; tile rows only.
        col_tile = cols
        row_tile = (budget // row_bytes) // row_align * row_align
        if row_tile >= rows:
            row_tile = rows
    else:
        # Rows are too wide: split the lane axis in multiples of 128.
        col_tile = max(128, (budget // (row_align * itemsize)) // 128 * 128)
        if col_tile >= cols:
            col_tile = cols
        row_tile = max(row_align, (budget // (col_tile * itemsize)) // row_align * row_align)
        if row_tile >= rows:
            row_tile = rows

    # Non-trivial inputs should produce >= 2 grid steps so v7x's two
    # TensorCores both get work (parallel axes are sharded across cores).
    if (pl.cdiv(rows, row_tile) * pl.cdiv(cols, col_tile) == 1
            and rows * cols * itemsize > (1 << 20)):
        if rows >= 2 * row_align:
            row_tile = _round_up((rows + 1) // 2, row_align)
        elif cols >= 256:
            col_tile = _round_up((cols + 1) // 2, 128)
    return row_tile, col_tile


def _frozen_bn_kernel(x_ref, scale_ref, shift_ref, o_ref):
    # Single vectorized FMA over a lane-dense tile; scale/shift broadcast from
    # either (row_tile, 1) or (1, col_tile).  Compute in f32, store packed.
    o_ref[...] = (x_ref[...] * scale_ref[...] + shift_ref[...]).astype(o_ref.dtype)


def _launch(x2, scale2, shift2, row_tile, col_tile, scale_along_rows):
    rows, cols = x2.shape
    grid_r = pl.cdiv(rows, row_tile)
    grid_c = pl.cdiv(cols, col_tile)
    x_block = (row_tile, col_tile)

    if scale_along_rows:
        # scale/shift vary with rows -> rows OUTER, cols inner (no per-step
        # re-DMA of the tiny scale/shift tiles).
        grid = (grid_r, grid_c)
        x_map = lambda i, j: (i, j)
        s_map = lambda i, j: (i, 0)
        s_block = (row_tile, 1)
    else:
        # scale/shift vary with columns -> cols OUTER, rows inner.
        grid = (grid_c, grid_r)
        x_map = lambda j, i: (i, j)
        s_map = lambda j, i: (0, j)
        s_block = (1, col_tile)

    return pl.pallas_call(
        _frozen_bn_kernel,
        out_shape=jax.ShapeDtypeStruct((rows, cols), x2.dtype),
        grid=grid,
        in_specs=[
            pl.BlockSpec(x_block, x_map),    # x tile
            pl.BlockSpec(s_block, s_map),    # scale
            pl.BlockSpec(s_block, s_map),    # shift
        ],
        out_specs=pl.BlockSpec(x_block, x_map),
        compiler_params=pltpu.CompilerParams(
            # Independent elementwise blocks: both axes shardable across
            # TensorCores on v7x; neutral on single-core v5e/v6e.
            dimension_semantics=("parallel", "parallel"),
        ),
    )(x2, scale2, shift2)


def frozen_batch_norm_2d(x, weight, bias, running_mean, running_var, eps=1e-5):
    """Frozen BatchNorm2d forward. x: (N, C, H, W); params: (C,)."""
    N, C, H, W = x.shape
    hw = H * W

    # Fold frozen stats into a per-channel affine transform (f32, trivial cost).
    w32 = weight.astype(jnp.float32)
    b32 = bias.astype(jnp.float32)
    rm32 = running_mean.astype(jnp.float32)
    rv32 = running_var.astype(jnp.float32)
    scale = w32 * lax.rsqrt(rv32 + jnp.float32(eps))   # (C,)
    shift = b32 - rm32 * scale                         # (C,)

    itemsize = jnp.dtype(x.dtype).itemsize
    budget = _tile_budget_bytes()
    row_align = _row_align(itemsize)

    if hw % 128 == 0 and hw >= 256:
        # Layout A: (N*C, H*W) — lane axis is the flattened spatial extent,
        # scale/shift are per-row (row r = n*C + c).
        rows, cols = N * C, hw
        x2 = x.reshape(rows, cols)
        scale2 = jnp.broadcast_to(scale[None, :], (N, C)).reshape(rows, 1)
        shift2 = jnp.broadcast_to(shift[None, :], (N, C)).reshape(rows, 1)
        scale_along_rows = True
    else:
        # Layout B (small / odd H*W): (N, C*H*W) — lane axis is C*H*W, which is
        # large and dense; scale/shift pre-broadcast along the lane axis.
        rows, cols = N, C * hw
        x2 = x.reshape(rows, cols)
        scale2 = jnp.broadcast_to(scale[:, None], (C, hw)).reshape(1, cols)
        shift2 = jnp.broadcast_to(shift[:, None], (C, hw)).reshape(1, cols)
        scale_along_rows = False

    row_tile, col_tile = _select_tiles(rows, cols, itemsize, budget, row_align)
    out2 = _launch(x2, scale2, shift2, row_tile, col_tile, scale_along_rows)
    return out2.reshape(N, C, H, W)


def frozen_batch_norm_2d_ref(x, weight, bias, running_mean, running_var, eps=1e-5):
    w = weight.reshape(1, -1, 1, 1)
    b = bias.reshape(1, -1, 1, 1)
    rv = running_var.reshape(1, -1, 1, 1)
    rm = running_mean.reshape(1, -1, 1, 1)
    scale = w * lax.rsqrt(rv + eps)
    bias_ = b - rm * scale
    return x * scale + bias_


if __name__ == "__main__":
    key = jax.random.PRNGKey(0)
    k_x, k_w, k_b, k_m, k_v, k_x2 = jax.random.split(key, 6)

    N, C, H, W = 2, 4, 16, 16
    x = jax.random.normal(k_x, (N, C, H, W), dtype=jnp.float32)

    # Deterministic "frozen" parameters (module __init__ gives shapes (C,)),
    # perturbed away from ones/zeros so the affine transform is exercised.
    weight = jnp.ones((C,), jnp.float32) + 0.1 * jax.random.normal(k_w, (C,))
    bias = jnp.zeros((C,), jnp.float32) + 0.1 * jax.random.normal(k_b, (C,))
    running_mean = 0.5 * jax.random.normal(k_m, (C,))
    running_var = jnp.ones((C,), jnp.float32) + 0.2 * jnp.abs(
        jax.random.normal(k_v, (C,))
    )

    # Main path: H*W = 256 (multiple of 128) -> lane-dense (N*C, H*W) layout.
    out = frozen_batch_norm_2d(x, weight, bias, running_mean, running_var)
    out = jax.block_until_ready(out)
    ref = frozen_batch_norm_2d_ref(x, weight, bias, running_mean, running_var)
    assert out.shape == (N, C, H, W)
    assert jnp.allclose(out, ref, atol=1e-5, rtol=1e-5), "mismatch vs reference"

    # Small/odd-spatial path: H*W = 49 (ResNet-style late stage) -> (N, C*H*W).
    Hs = Ws = 7
    x_s = jax.random.normal(k_x2, (N, C, Hs, Ws), dtype=jnp.float32)
    out_s = frozen_batch_norm_2d(x_s, weight, bias, running_mean, running_var)
    out_s = jax.block_until_ready(out_s)
    ref_s = frozen_batch_norm_2d_ref(x_s, weight, bias, running_mean, running_var)
    assert out_s.shape == (N, C, Hs, Ws)
    assert jnp.allclose(out_s, ref_s, atol=1e-5, rtol=1e-5), "mismatch (small-spatial)"

    print("KERNEL_OK")
</pallas_src>

<mosaic_0001>
module attributes {stable_mosaic.version = 11 : i64} {
  func.func @_frozen_bn_kernel(%arg0: i32, %arg1: i32, %arg2: memref<8x256xf32, #tpu.memory_space<vmem>>, %arg3: memref<8x1xf32, #tpu.memory_space<vmem>>, %arg4: memref<8x1xf32, #tpu.memory_space<vmem>>, %arg5: memref<8x256xf32, #tpu.memory_space<vmem>>) attributes {dimension_semantics = [#tpu.dimension_semantics<parallel>, #tpu.dimension_semantics<parallel>], iteration_bounds = array<i64: 1, 1>, scalar_prefetch = 0 : i64, scratch_operands = 0 : i64, tpu.core_type = #tpu.core_type<tc>, window_params = [{transform_indices = @transform_0, window_bounds = array<i64: 8, 256>}, {transform_indices = @transform_1, window_bounds = array<i64: 8, 1>}, {transform_indices = @transform_2, window_bounds = array<i64: 8, 1>}, {transform_indices = @transform_3, window_bounds = array<i64: 8, 256>}]} {
    %c0 = arith.constant 0 : index
    %c0_0 = arith.constant 0 : index
    %0 = vector.load %arg2[%c0, %c0_0] : memref<8x256xf32, #tpu.memory_space<vmem>>, vector<8x256xf32>
    %c0_1 = arith.constant 0 : index
    %c0_2 = arith.constant 0 : index
    %1 = vector.load %arg3[%c0_1, %c0_2] : memref<8x1xf32, #tpu.memory_space<vmem>>, vector<8x1xf32>
    %2 = vector.broadcast %1 : vector<8x1xf32> to vector<8x256xf32>
    %3 = arith.mulf %0, %2 : vector<8x256xf32>
    %c0_3 = arith.constant 0 : index
    %c0_4 = arith.constant 0 : index
    %4 = vector.load %arg4[%c0_3, %c0_4] : memref<8x1xf32, #tpu.memory_space<vmem>>, vector<8x1xf32>
    %5 = vector.broadcast %4 : vector<8x1xf32> to vector<8x256xf32>
    %6 = arith.addf %3, %5 : vector<8x256xf32>
    %c0_5 = arith.constant 0 : index
    %c0_6 = arith.constant 0 : index
    %7 = vector.load %arg5[%c0_5, %c0_6] : memref<8x256xf32, #tpu.memory_space<vmem>>, vector<8x256xf32>
    tpu.vector_store %arg5[%c0_5, %c0_6], %6 {strides = array<i32>} : memref<8x256xf32, #tpu.memory_space<vmem>>, vector<8x256xf32>,
    return
  }
  func.func @transform_0(%arg0: i32, %arg1: i32) -> (i32, i32) {
    %c0_i32 = arith.constant 0 : i32
    return %arg0, %arg1 : i32, i32
  }
  func.func @transform_1(%arg0: i32, %arg1: i32) -> (i32, i32) {
    %c0_i32 = arith.constant 0 : i32
    %c0_i32_0 = arith.constant 0 : i32
    return %arg0, %c0_i32 : i32, i32
  }
  func.func @transform_2(%arg0: i32, %arg1: i32) -> (i32, i32) {
    %c0_i32 = arith.constant 0 : i32
    %c0_i32_0 = arith.constant 0 : i32
    return %arg0, %c0_i32 : i32, i32
  }
  func.func @transform_3(%arg0: i32, %arg1: i32) -> (i32, i32) {
    %c0_i32 = arith.constant 0 : i32
    return %arg0, %arg1 : i32, i32
  }
}

</mosaic_0001>

<llo_original>
// kernel: tpu_custom_call.1
$region0: #{tpu_custom_call.1}
  #allocation0 [shape = 'u32[]', space=smem, size = 0x4, offset = 0x4, fixed_abs, tag = 'smem constant byte address 0x4 - core index']
  #allocation1 [shape = 'u32[144,128]{1,0:T(1,128)}', space=vmem, size = 0x12000, scoped, tag = 'internal scratch']
  %s0 = inlined_call_operand.vmem [shape: f32[8,256], index: 0, kind: input, shape index: {}]
  %s1 = inlined_call_operand.vmem [shape: f32[8,1], index: 1, kind: input, shape index: {}]
  %s2 = inlined_call_operand.vmem [shape: f32[8,1], index: 2, kind: input, shape index: {}]
  %s3 = inlined_call_operand.hbm [shape: f32[8,256], index: 3, kind: output, shape index: {}]
  %s4 = sld [smem:[#allocation0]]
  $region22: #{tpu_custom_call.1} parent=0
    _
  %s6 = ssub.s32 1, %s4
  %s7 = scalar_select 0, %s6, %s4
  $region1: #{tpu_custom_call.1} parent=0
    #allocation2 [shape = 'u8[8192]{0}', space=vmem, size = 0x2000, scoped, tag = 'output window, operand 0, single buffered']
    #allocation3 [shape = 's32[1]{0}', space=sflag, size = 0x4, scoped, tag = 'scoped memory for tpu_custom_call.1']
    %8 = vsyncpa [#allocation3], 0
    // Predicated region
    $region2: #{tpu_custom_call.1} parent=1 // pred_check
      _
    $region3: #{tpu_custom_call.1} parent=1 // pred_check_branch
      %10 = sbr.rel (0) target = $region5
    $region4: #{tpu_custom_call.1} parent=1 // pred_region
      _
    $region5: #{tpu_custom_call.1} parent=1 // pred_fallthru
      _
    // Predicated region
    $region6: #{tpu_custom_call.1} parent=1 // pred_check
      _
    $region7: #{tpu_custom_call.1} parent=1 // pred_check_branch
      %12 = sbr.rel (0) target = $region9
    $region8: #{tpu_custom_call.1} parent=1 // pred_region
      _
    $region9: #{tpu_custom_call.1} parent=1 // pred_fallthru
      _
    // Predicated region
    $region10: #{tpu_custom_call.1} parent=1 // pred_check
      _
    $region11: #{tpu_custom_call.1} parent=1 // pred_check_branch
      %14 = sbr.rel (0) target = $region13
    $region12: #{tpu_custom_call.1} parent=1 // pred_region
      _
    $region13: #{tpu_custom_call.1} parent=1 // pred_fallthru
      _
    %v15 = vld [vmem:[%s0] sm:$0xff]
    %v16 = vld [vmem:[%s0 + $0x8] sm:$0xff]
    %v17 = vld [vmem:[%s1] sm:$0xff]
    %19 = vset.pattern.permute.xlu0 0
    %20 = vperm.xlu0 %19, %v17
    %v21 = vpop.permute.xlu0 %20
    %v23 = vmul.f32 %v15, %v21
    %v24 = vmul.f32 %v16, %v21
    %v25 = vld [vmem:[%s2] sm:$0xff]
    %27 = vset.pattern.permute.xlu0 0
    %28 = vperm.xlu0 %27, %v25
    %v29 = vpop.permute.xlu0 %28
    %v31 = vadd.f32 %v23, %v29
    %v32 = vadd.f32 %v24, %v29
    %33 = vst [vmem:[#allocation2] sm:$0xff] %v31
    %34 = vst [vmem:[#allocation2 + $0x8] sm:$0xff] %v32
    // Predicated region
    $region14: #{tpu_custom_call.1} parent=1 // pred_check
      _
    $region15: #{tpu_custom_call.1} parent=1 // pred_check_branch
      %36 = sbr.rel (0) target = $region17
    $region16: #{tpu_custom_call.1} parent=1 // pred_region
      %s38 = ssub.s32 256, 256
      %39 = vsyncadd [#allocation3], %s38
      %s41 = sshll.u32 [#allocation2], 4
      %s42 = int_to_ptr.vmem [resolvable:$true] %s41
      %44 = dma.vmem_to_hbm [thread:$0]  %s42, 256, %s3, [#allocation3]
    $region17: #{tpu_custom_call.1} parent=1 // pred_fallthru
      _
    // Predicated region
    $region18: #{tpu_custom_call.1} parent=1 // pred_check
      _
    $region19: #{tpu_custom_call.1} parent=1 // pred_check_branch
      %46 = sbr.rel (0) target = $region21
    $region20: #{tpu_custom_call.1} parent=1 // pred_region
      %47 = dma.done [#allocation3], 256
    $region21: #{tpu_custom_call.1} parent=1 // pred_fallthru
      _
    %48 = vsyncpa [#allocation3], 1

</llo_original>
